<compile_context>
chip_gen: v6e
topology: v6e:2x2x1
jax: 0.10.0
libtpu: 0.0.40
codegen_flags: <defaults>
</compile_context>

<pallas_src>
import math

import jax
import jax.numpy as jnp
from jax import lax
from jax.experimental import pallas as pl
from jax.experimental.pallas import tpu as pltpu

WINDOW_SIZE = 11
SIGMA = 1.5
C1 = 0.01 ** 2
C2 = 0.03 ** 2


def gaussian_1d(window_size: int, sigma: float) -> jnp.ndarray:
    half = window_size // 2
    g = jnp.array(
        [math.exp(-((x - half) ** 2) / float(2 * sigma ** 2)) for x in range(window_size)],
        dtype=jnp.float32,
    )
    return g / jnp.sum(g)


def band_matrix(n: int, g: jnp.ndarray, n_valid: int) -> jnp.ndarray:
    """A[i, k] = g[k - i + half] for |k - i| <= half (zero 'same' padding).

    Rows i >= n_valid are zeroed so conv outputs at padded positions are
    exactly 0.0 (=> SSIM exactly 1.0 there; corrected analytically in the
    wrapper)."""
    ws = g.shape[0]
    half = ws // 2
    i = jnp.arange(n)[:, None]
    k = jnp.arange(n)[None, :]
    d = k - i + half
    valid = (d >= 0) & (d < ws) & (i < n_valid)
    return jnp.where(valid, g[jnp.clip(d, 0, ws - 1)], 0.0).astype(jnp.float32)


def _round_up(x: int, m: int) -> int:
    return -(-x // m) * m


def _make_ssim_kernel(Bn: int, Hp: int, Wp: int):
    def kernel(x1_ref, x2_ref, awt_ref, ahb_ref, out_ref):
        # (Bn, Hp, Wp) -> (Bn*Hp, Wp): layout-trivial merge (Hp % 8 == 0).
        x1 = x1_ref[...].reshape(Bn * Hp, Wp)
        x2 = x2_ref[...].reshape(Bn * Hp, Wp)
        awt = awt_ref[...]        # (Wp, Wp)        W-conv, applied from the right
        ahb = ahb_ref[...]        # (Bn*Hp, Bn*Hp)  block-diag H-conv, from the left

        def sep_conv(v):
            t = jnp.dot(v, awt, preferred_element_type=jnp.float32)
            return jnp.dot(ahb, t, preferred_element_type=jnp.float32)

        # Five separate dots against the same resident weights (no concat).
        mu1 = sep_conv(x1)
        mu2 = sep_conv(x2)
        e11 = sep_conv(x1 * x1)
        e22 = sep_conv(x2 * x2)
        e12 = sep_conv(x1 * x2)

        mu1_sq = mu1 * mu1
        mu2_sq = mu2 * mu2
        mu1_mu2 = mu1 * mu2
        sigma1_sq = e11 - mu1_sq
        sigma2_sq = e22 - mu2_sq
        sigma12 = e12 - mu1_mu2

        num = (2.0 * mu1_mu2 + C1) * (2.0 * sigma12 + C2)
        den = (mu1_sq + mu2_sq + C1) * (sigma1_sq + sigma2_sq + C2)
        ssim_map = num / den                                   # (Bn*Hp, Wp)

        # Sublane-only partial reduce (pure VPU vreg adds, no cross-lane XLU);
        # the wrapper finishes the reduction.
        partial = ssim_map.reshape(Bn * Hp // 8, 8, Wp).sum(axis=0)
        out_ref[...] = partial.reshape(1, 8, Wp)

    return kernel


def ssim_loss_pallas(target: jnp.ndarray, pred: jnp.ndarray) -> jnp.ndarray:
    """DSSIM loss matching the PyTorch SSIM module (window_size=11, channel=1,
    size_average=True). Inputs are NCHW with C == 1."""
    assert target.shape == pred.shape
    assert target.ndim == 4 and target.shape[1] == 1, "module hardcodes channel=1"
    N, _, H, W = target.shape

    x1 = target.reshape(N, H, W).astype(jnp.float32)
    x2 = pred.reshape(N, H, W).astype(jnp.float32)

    Hp = _round_up(H, 8)      # sublane-aligned: (Bn, Hp) -> Bn*Hp merge is free
    Wp = _round_up(W, 128)    # lane-dense elementwise stage + unmasked stores

    # ---- generation-aware VMEM budget --------------------------------------
    try:
        vmem_cap = int(pltpu.get_tpu_info().vmem_capacity_bytes)
    except Exception:
        vmem_cap = 64 * 1024 * 1024
    # ~64 MiB on v5e/v6e (128 MiB physical), ~48 MiB on v7x (64 MiB per TC).
    vmem_limit = max(32 * 1024 * 1024, min(64 * 1024 * 1024, (vmem_cap * 3) // 4))

    FUSION = 18  # ~live block-sized f32 intermediates incl. double-buffered inputs

    def fits(bn: int) -> bool:
        kh = bn * Hp
        block_bytes = FUSION * bn * Hp * Wp * 4
        weight_bytes = 2 * 4 * (kh * kh + Wp * Wp)    # both weight blocks, 2 buffers
        return block_bytes + weight_bytes <= (vmem_limit * 7) // 10

    # Caps: keep blockdiag(A_h) <= ~512 wide (MXU fill without excessive zero
    # FLOPs) and keep >= 2 grid steps when N >= 2 so v7x shards across 2 TCs.
    bn_cap = max(1, min(N, 512 // Hp if Hp <= 512 else 1))
    if N >= 2:
        bn_cap = max(1, min(bn_cap, -(-N // 2)))
    Bn = 1
    for b in range(bn_cap, 0, -1):
        if fits(b):
            Bn = b
            break
    # TODO(synk): very large single images (Hp*Wp*4 >~ 2 MiB) need an H-panel
    # grid axis with an 11-tap halo (and a banded conv instead of the dense
    # Toeplitz matmul) rather than relying on Bn=1 fitting VMEM.

    G = -(-N // Bn)            # grid steps
    Np = G * Bn
    x1 = jnp.pad(x1, ((0, Np - N), (0, Hp - H), (0, Wp - W)))
    x2 = jnp.pad(x2, ((0, Np - N), (0, Hp - H), (0, Wp - W)))

    g = gaussian_1d(WINDOW_SIZE, SIGMA)
    awt = band_matrix(Wp, g, W).T                          # (Wp, Wp)
    a_h = band_matrix(Hp, g, H)                            # (Hp, Hp)
    ahb = jnp.kron(jnp.eye(Bn, dtype=jnp.float32), a_h)    # (Bn*Hp, Bn*Hp)

    kernel = _make_ssim_kernel(Bn, Hp, Wp)

    partial = pl.pallas_call(
        kernel,
        out_shape=jax.ShapeDtypeStruct((G, 8, Wp), jnp.float32),
        grid_spec=pltpu.PrefetchScalarGridSpec(
            num_scalar_prefetch=0,
            grid=(G,),
            in_specs=[
                pl.BlockSpec((Bn, Hp, Wp), lambda b: (b, 0, 0)),
                pl.BlockSpec((Bn, Hp, Wp), lambda b: (b, 0, 0)),
                # constant-index weight blocks (DMA'd once by the pipeline)
                pl.BlockSpec((Wp, Wp), lambda b: (0, 0)),
                pl.BlockSpec((Bn * Hp, Bn * Hp), lambda b: (0, 0)),
            ],
            out_specs=pl.BlockSpec((1, 8, Wp), lambda b: (b, 0, 0)),
        ),
        compiler_params=pltpu.CompilerParams(
            dimension_semantics=("parallel",),
            vmem_limit_bytes=int(vmem_limit),
        ),
    )(x1, x2, awt, ahb)

    total = jnp.sum(partial)
    # Every padded pixel (batch pad, H pad, W pad) contributes exactly 1.0:
    # its conv outputs are forced to exactly 0 by the zeroed band-matrix rows,
    # so num == den == C1*C2 bitwise.
    pad_contrib = float(Np * Hp * Wp - N * H * W)
    mean_ssim = (total - pad_contrib) / float(N * H * W)
    return (1.0 - mean_ssim) / 2.0


def ssim_loss_reference(target: jnp.ndarray, pred: jnp.ndarray) -> jnp.ndarray:
    """Pure-JAX reference using an explicit 2-D conv (mirrors the PyTorch code)."""
    g = gaussian_1d(WINDOW_SIZE, SIGMA)
    win2d = jnp.outer(g, g).reshape(1, 1, WINDOW_SIZE, WINDOW_SIZE)
    pad = WINDOW_SIZE // 2

    def conv(x):
        return lax.conv_general_dilated(
            x.astype(jnp.float32), win2d,
            window_strides=(1, 1),
            padding=[(pad, pad), (pad, pad)],
            dimension_numbers=("NCHW", "OIHW", "NCHW"),
            precision=lax.Precision.HIGHEST,
        )

    img1 = target.astype(jnp.float32)
    img2 = pred.astype(jnp.float32)
    mu1, mu2 = conv(img1), conv(img2)
    mu1_sq, mu2_sq, mu1_mu2 = mu1 * mu1, mu2 * mu2, mu1 * mu2
    sigma1_sq = conv(img1 * img1) - mu1_sq
    sigma2_sq = conv(img2 * img2) - mu2_sq
    sigma12 = conv(img1 * img2) - mu1_mu2
    ssim_map = ((2 * mu1_mu2 + C1) * (2 * sigma12 + C2)) / (
        (mu1_sq + mu2_sq + C1) * (sigma1_sq + sigma2_sq + C2)
    )
    ssim = jnp.mean(ssim_map)
    return (1.0 - ssim) / 2.0


if __name__ == "__main__":
    key = jax.random.PRNGKey(0)
    k1, k2 = jax.random.split(key)
    N, C, H, W = 2, 1, 16, 16   # module hardcodes channel = 1
    target = jax.random.uniform(k1, (N, C, H, W), dtype=jnp.float32)
    pred = jax.random.uniform(k2, (N, C, H, W), dtype=jnp.float32)

    dssim = jax.block_until_ready(ssim_loss_pallas(target, pred))
    ref = jax.block_until_ready(ssim_loss_reference(target, pred))

    # Loss-level tolerance: MXU f32 matmul passes vs a direct 11x11 conv.
    assert jnp.allclose(dssim, ref, rtol=2e-3, atol=2e-3), (dssim, ref)
    print("KERNEL_OK")
</pallas_src>

<mosaic_0001>
module attributes {stable_mosaic.version = 11 : i64} {
  func.func @kernel(%arg0: i32, %arg1: memref<1x16x128xf32, #tpu.memory_space<vmem>>, %arg2: memref<1x16x128xf32, #tpu.memory_space<vmem>>, %arg3: memref<128x128xf32, #tpu.memory_space<vmem>>, %arg4: memref<16x16xf32, #tpu.memory_space<vmem>>, %arg5: memref<1x8x128xf32, #tpu.memory_space<vmem>>) attributes {dimension_semantics = [#tpu.dimension_semantics<parallel>], iteration_bounds = array<i64: 2>, scalar_prefetch = 0 : i64, scratch_operands = 0 : i64, tpu.core_type = #tpu.core_type<tc>, window_params = [{transform_indices = @transform_0, window_bounds = array<i64: 1, 16, 128>}, {transform_indices = @transform_1, window_bounds = array<i64: 1, 16, 128>}, {pipeline_mode = #tpu.pipeline_mode<synchronous>, transform_indices = @transform_2, window_bounds = array<i64: 128, 128>}, {pipeline_mode = #tpu.pipeline_mode<synchronous>, transform_indices = @transform_3, window_bounds = array<i64: 16, 16>}, {transform_indices = @transform_4, window_bounds = array<i64: 1, 8, 128>}]} {
    %c0 = arith.constant 0 : index
    %c0_0 = arith.constant 0 : index
    %c0_1 = arith.constant 0 : index
    %0 = vector.load %arg1[%c0, %c0_0, %c0_1] : memref<1x16x128xf32, #tpu.memory_space<vmem>>, vector<1x16x128xf32>
    %1 = vector.shape_cast %0 : vector<1x16x128xf32> to vector<16x128xf32>
    %c0_2 = arith.constant 0 : index
    %c0_3 = arith.constant 0 : index
    %c0_4 = arith.constant 0 : index
    %2 = vector.load %arg2[%c0_2, %c0_3, %c0_4] : memref<1x16x128xf32, #tpu.memory_space<vmem>>, vector<1x16x128xf32>
    %3 = vector.shape_cast %2 : vector<1x16x128xf32> to vector<16x128xf32>
    %c0_5 = arith.constant 0 : index
    %c0_6 = arith.constant 0 : index
    %4 = vector.load %arg3[%c0_5, %c0_6] : memref<128x128xf32, #tpu.memory_space<vmem>>, vector<128x128xf32>
    %c0_7 = arith.constant 0 : index
    %c0_8 = arith.constant 0 : index
    %5 = vector.load %arg4[%c0_7, %c0_8] : memref<16x16xf32, #tpu.memory_space<vmem>>, vector<16x16xf32>
    %cst = arith.constant dense<0.000000e+00> : vector<16x128xf32>
    %6 = tpu.matmul %1, %4, %cst {dimension_numbers = #tpu.dot_dimension_numbers<[1], [0], [0], [1], [0, 0, 1, 1], [], []>} : vector<16x128xf32>, vector<128x128xf32>, vector<16x128xf32> -> vector<16x128xf32>
    %cst_9 = arith.constant dense<0.000000e+00> : vector<16x128xf32>
    %7 = tpu.matmul %5, %6, %cst_9 {dimension_numbers = #tpu.dot_dimension_numbers<[1], [0], [0], [1], [0, 0, 1, 1], [], []>} : vector<16x16xf32>, vector<16x128xf32>, vector<16x128xf32> -> vector<16x128xf32>
    %cst_10 = arith.constant dense<0.000000e+00> : vector<16x128xf32>
    %8 = tpu.matmul %3, %4, %cst_10 {dimension_numbers = #tpu.dot_dimension_numbers<[1], [0], [0], [1], [0, 0, 1, 1], [], []>} : vector<16x128xf32>, vector<128x128xf32>, vector<16x128xf32> -> vector<16x128xf32>
    %cst_11 = arith.constant dense<0.000000e+00> : vector<16x128xf32>
    %9 = tpu.matmul %5, %8, %cst_11 {dimension_numbers = #tpu.dot_dimension_numbers<[1], [0], [0], [1], [0, 0, 1, 1], [], []>} : vector<16x16xf32>, vector<16x128xf32>, vector<16x128xf32> -> vector<16x128xf32>
    %10 = arith.mulf %1, %1 : vector<16x128xf32>
    %cst_12 = arith.constant dense<0.000000e+00> : vector<16x128xf32>
    %11 = tpu.matmul %10, %4, %cst_12 {dimension_numbers = #tpu.dot_dimension_numbers<[1], [0], [0], [1], [0, 0, 1, 1], [], []>} : vector<16x128xf32>, vector<128x128xf32>, vector<16x128xf32> -> vector<16x128xf32>
    %cst_13 = arith.constant dense<0.000000e+00> : vector<16x128xf32>
    %12 = tpu.matmul %5, %11, %cst_13 {dimension_numbers = #tpu.dot_dimension_numbers<[1], [0], [0], [1], [0, 0, 1, 1], [], []>} : vector<16x16xf32>, vector<16x128xf32>, vector<16x128xf32> -> vector<16x128xf32>
    %13 = arith.mulf %3, %3 : vector<16x128xf32>
    %cst_14 = arith.constant dense<0.000000e+00> : vector<16x128xf32>
    %14 = tpu.matmul %13, %4, %cst_14 {dimension_numbers = #tpu.dot_dimension_numbers<[1], [0], [0], [1], [0, 0, 1, 1], [], []>} : vector<16x128xf32>, vector<128x128xf32>, vector<16x128xf32> -> vector<16x128xf32>
    %cst_15 = arith.constant dense<0.000000e+00> : vector<16x128xf32>
    %15 = tpu.matmul %5, %14, %cst_15 {dimension_numbers = #tpu.dot_dimension_numbers<[1], [0], [0], [1], [0, 0, 1, 1], [], []>} : vector<16x16xf32>, vector<16x128xf32>, vector<16x128xf32> -> vector<16x128xf32>
    %16 = arith.mulf %1, %3 : vector<16x128xf32>
    %cst_16 = arith.constant dense<0.000000e+00> : vector<16x128xf32>
    %17 = tpu.matmul %16, %4, %cst_16 {dimension_numbers = #tpu.dot_dimension_numbers<[1], [0], [0], [1], [0, 0, 1, 1], [], []>} : vector<16x128xf32>, vector<128x128xf32>, vector<16x128xf32> -> vector<16x128xf32>
    %cst_17 = arith.constant dense<0.000000e+00> : vector<16x128xf32>
    %18 = tpu.matmul %5, %17, %cst_17 {dimension_numbers = #tpu.dot_dimension_numbers<[1], [0], [0], [1], [0, 0, 1, 1], [], []>} : vector<16x16xf32>, vector<16x128xf32>, vector<16x128xf32> -> vector<16x128xf32>
    %19 = arith.mulf %7, %7 : vector<16x128xf32>
    %20 = arith.mulf %9, %9 : vector<16x128xf32>
    %21 = arith.mulf %7, %9 : vector<16x128xf32>
    %22 = arith.subf %12, %19 : vector<16x128xf32>
    %23 = arith.subf %15, %20 : vector<16x128xf32>
    %24 = arith.subf %18, %21 : vector<16x128xf32>
    %cst_18 = arith.constant 2.000000e+00 : f32
    %25 = vector.broadcast %cst_18 : f32 to vector<16x128xf32>
    %26 = arith.mulf %25, %21 : vector<16x128xf32>
    %cst_19 = arith.constant 9.99999974E-5 : f32
    %27 = vector.broadcast %cst_19 : f32 to vector<16x128xf32>
    %28 = arith.addf %26, %27 : vector<16x128xf32>
    %cst_20 = arith.constant 2.000000e+00 : f32
    %29 = vector.broadcast %cst_20 : f32 to vector<16x128xf32>
    %30 = arith.mulf %29, %24 : vector<16x128xf32>
    %cst_21 = arith.constant 8.99999984E-4 : f32
    %31 = vector.broadcast %cst_21 : f32 to vector<16x128xf32>
    %32 = arith.addf %30, %31 : vector<16x128xf32>
    %33 = arith.mulf %28, %32 : vector<16x128xf32>
    %34 = arith.addf %19, %20 : vector<16x128xf32>
    %cst_22 = arith.constant 9.99999974E-5 : f32
    %35 = vector.broadcast %cst_22 : f32 to vector<16x128xf32>
    %36 = arith.addf %34, %35 : vector<16x128xf32>
    %37 = arith.addf %22, %23 : vector<16x128xf32>
    %cst_23 = arith.constant 8.99999984E-4 : f32
    %38 = vector.broadcast %cst_23 : f32 to vector<16x128xf32>
    %39 = arith.addf %37, %38 : vector<16x128xf32>
    %40 = arith.mulf %36, %39 : vector<16x128xf32>
    %41 = arith.divf %33, %40 : vector<16x128xf32>
    %42 = vector.shape_cast %41 : vector<16x128xf32> to vector<2x8x128xf32>
    %cst_24 = arith.constant dense<0.000000e+00> : vector<8x128xf32>
    %43 = vector.multi_reduction <add>, %42, %cst_24 [0] : vector<2x8x128xf32> to vector<8x128xf32>
    %44 = vector.shape_cast %43 : vector<8x128xf32> to vector<1x8x128xf32>
    %c0_25 = arith.constant 0 : index
    %c0_26 = arith.constant 0 : index
    %c0_27 = arith.constant 0 : index
    %45 = vector.load %arg5[%c0_25, %c0_26, %c0_27] : memref<1x8x128xf32, #tpu.memory_space<vmem>>, vector<1x8x128xf32>
    tpu.vector_store %arg5[%c0_25, %c0_26, %c0_27], %44 {strides = array<i32>} : memref<1x8x128xf32, #tpu.memory_space<vmem>>, vector<1x8x128xf32>,
    return
  }
  func.func @transform_0(%arg0: i32) -> (i32, i32, i32) {
    %c0_i32 = arith.constant 0 : i32
    %c0_i32_0 = arith.constant 0 : i32
    %c0_i32_1 = arith.constant 0 : i32
    return %arg0, %c0_i32, %c0_i32_0 : i32, i32, i32
  }
  func.func @transform_1(%arg0: i32) -> (i32, i32, i32) {
    %c0_i32 = arith.constant 0 : i32
    %c0_i32_0 = arith.constant 0 : i32
    %c0_i32_1 = arith.constant 0 : i32
    return %arg0, %c0_i32, %c0_i32_0 : i32, i32, i32
  }
  func.func @transform_2(%arg0: i32) -> (i32, i32) {
    %c0_i32 = arith.constant 0 : i32
    %c0_i32_0 = arith.constant 0 : i32
    %c0_i32_1 = arith.constant 0 : i32
    return %c0_i32, %c0_i32_0 : i32, i32
  }
  func.func @transform_3(%arg0: i32) -> (i32, i32) {
    %c0_i32 = arith.constant 0 : i32
    %c0_i32_0 = arith.constant 0 : i32
    %c0_i32_1 = arith.constant 0 : i32
    return %c0_i32, %c0_i32_0 : i32, i32
  }
  func.func @transform_4(%arg0: i32) -> (i32, i32, i32) {
    %c0_i32 = arith.constant 0 : i32
    %c0_i32_0 = arith.constant 0 : i32
    %c0_i32_1 = arith.constant 0 : i32
    return %arg0, %c0_i32, %c0_i32_0 : i32, i32, i32
  }
}

</mosaic_0001>

<llo_original>
// kernel: tpu_custom_call.1
$region0: #{tpu_custom_call.1}
  #allocation0 [shape = 'u32[]', space=smem, size = 0x4, offset = 0x4, fixed_abs, tag = 'smem constant byte address 0x4 - core index']
  #allocation1 [shape = 'u32[144,128]{1,0:T(1,128)}', space=vmem, size = 0x12000, scoped, tag = 'internal scratch']
  %s0 = inlined_call_operand.hbm [shape: f32[2,16,128], index: 0, kind: input, shape index: {}]
  %s1 = inlined_call_operand.hbm [shape: f32[2,16,128], index: 1, kind: input, shape index: {}]
  %s2 = inlined_call_operand.hbm [shape: f32[128,128], index: 2, kind: input, shape index: {}]
  %s3 = inlined_call_operand.hbm [shape: f32[16,16], index: 3, kind: input, shape index: {}]
  %s4 = inlined_call_operand.hbm [shape: f32[2,8,128], index: 4, kind: output, shape index: {}]
  %s5 = sld [smem:[#allocation0]]
  $region65: #{tpu_custom_call.1} parent=0
    _
  %s7 = ssub.s32 1, %s5
  %s8 = scalar_select 0, %s7, %s5
  $region1: #{tpu_custom_call.1} parent=0
    #allocation2 [shape = 'u8[16384]{0}', space=vmem, size = 0x4000, scoped, tag = 'input window, operand 0']
    #allocation3 [shape = 's32[2]{0}', space=sflag, size = 0x8, scoped, tag = 'scoped memory for tpu_custom_call.1']
    #allocation4 [shape = 's32[2]{0}', space=sflag, size = 0x8, scoped, tag = 'scoped memory for tpu_custom_call.1']
    #allocation5 [shape = 'u8[16384]{0}', space=vmem, size = 0x4000, scoped, tag = 'input window, operand 1']
    #allocation6 [shape = 's32[2]{0}', space=sflag, size = 0x8, scoped, tag = 'scoped memory for tpu_custom_call.1']
    #allocation7 [shape = 'u8[65536]{0}', space=vmem, size = 0x10000, scoped, tag = 'input window, operand 2, single buffered']
    #allocation8 [shape = 'u8[8192]{0}', space=vmem, size = 0x2000, scoped, tag = 'input window, operand 3, single buffered']
    #allocation9 [shape = 's32[1]{0}', space=sflag, size = 0x4, scoped, tag = 'scoped memory for tpu_custom_call.1']
    #allocation10 [shape = 'u8[8192]{0}', space=vmem, size = 0x2000, scoped, tag = 'output window, operand 0']
    %9 = vsyncpa [#allocation3], 0
    %s10 = scalar_lea.sflag [#allocation3], 1
    %11 = vsyncpa %s10, 0
    %12 = vsyncpa [#allocation6], 0
    %s13 = scalar_lea.sflag [#allocation6], 1
    %14 = vsyncpa %s13, 0
    %15 = vsyncpa [#allocation9], 0
    %16 = vsyncpa [#allocation4], 0
    %s17 = scalar_lea.sflag [#allocation4], 1
    %18 = vsyncpa %s17, 0
    loop: start=0, step=1, limit=4
    $region2: #{tpu_custom_call.1} parent=1 // loop_pre_header
      _
    $region3: #{tpu_custom_call.1} parent=1 // loop_header
      %s20 = sphi 0, %s24
      %p21 = scmp.ge.s32.totalorder %s20, 4
      %s30 = sphi 0, %s32
      %s33 = sphi 0, %s30
      %s34 = sphi 0, %s33
      %s50 = sphi 0, %s34
      %s56 = sphi 0, %s58
      %s59 = sphi 0, %s56
      %s60 = sphi 0, %s59
      %s76 = sphi 0, %s60
      %s80 = sphi 0, %s80
      %s82 = sphi 0, %s80
      %s83 = sphi 0, %s82
      %s97 = sphi 0, %s83
      %s101 = sphi 0, %s101
      %s103 = sphi 0, %s101
      %s104 = sphi 0, %s103
      %s118 = sphi 0, %s104
      %s124 = sphi 0, %s126
      %s127 = sphi 0, %s124
      %s128 = sphi 0, %s127
      %s144 = sphi 0, %s128
    $region4: #{tpu_custom_call.1} parent=1 // loop_header_branch
      %23 = sbr.rel (%p21) target = $region8
    $region5: #{tpu_custom_call.1} parent=1 // loop_body
      %s25 = ssub.s32 %s20, 1
      %s26 = ssub.s32 %s20, 2
      %s27 = sadd.s32 %s20, 1
      %s28 = ssub.s32 %s20, %s27
      %p29 = scmp.eq.s32.totalorder %s28, 0
      %s31 = sadd.s32 %s30, 1
      %s32 = scalar_select %p29, %s30, %s31
      %p35 = pneg %p29
      %p36 = scmp.eq.s32.totalorder %s20, 1
      %p37 = por %p35, %p36
      %p38 = scmp.ne.s32.totalorder %s30, %s33
      %p39 = scmp.eq.s32.totalorder %s20, 0
      %p40 = por %p38, %p39
      %p41 = scmp.ne.s32.totalorder %s30, %s33
      %p42 = scmp.eq.s32.totalorder %s25, 1
      %p43 = por %p41, %p42
      %p44 = scmp.ne.s32.totalorder %s33, %s34
      %p45 = scmp.eq.s32.totalorder %s25, 0
      %p46 = por %p44, %p45
      %p47 = scmp.ne.s32.totalorder %s33, %s34
      %p48 = scmp.eq.s32.totalorder %s26, 1
      %p49 = por %p47, %p48
      %p51 = scmp.ne.s32.totalorder %s34, %s50
      %p52 = scmp.eq.s32.totalorder %s26, 0
      %p53 = por %p51, %p52
      %s54 = ssub.s32 %s20, %s27
      %p55 = scmp.eq.s32.totalorder %s54, 0
      %s57 = sadd.s32 %s56, 1
      %s58 = scalar_select %p55, %s56, %s57
      %p61 = pneg %p55
      %p62 = scmp.eq.s32.totalorder %s20, 1
      %p63 = por %p61, %p62
      %p64 = scmp.ne.s32.totalorder %s56, %s59
      %p65 = scmp.eq.s32.totalorder %s20, 0
      %p66 = por %p64, %p65
      %p67 = scmp.ne.s32.totalorder %s56, %s59
      %p68 = scmp.eq.s32.totalorder %s25, 1
      %p69 = por %p67, %p68
      %p70 = scmp.ne.s32.totalorder %s59, %s60
      %p71 = scmp.eq.s32.totalorder %s25, 0
      %p72 = por %p70, %p71
      %p73 = scmp.ne.s32.totalorder %s59, %s60
      %p74 = scmp.eq.s32.totalorder %s26, 1
      %p75 = por %p73, %p74
      %p77 = scmp.ne.s32.totalorder %s60, %s76
      %p78 = scmp.eq.s32.totalorder %s26, 0
      %p79 = por %p77, %p78
      %s81 = sadd.s32 %s80, 1
      %p84 = scmp.eq.s32.totalorder %s20, 1
      %p85 = scmp.ne.s32.totalorder %s80, %s82
      %p86 = scmp.eq.s32.totalorder %s20, 0
      %p87 = por %p85, %p86
      %p88 = scmp.ne.s32.totalorder %s80, %s82
      %p89 = scmp.eq.s32.totalorder %s25, 1
      %p90 = por %p88, %p89
      %p91 = scmp.ne.s32.totalorder %s82, %s83
      %p92 = scmp.eq.s32.totalorder %s25, 0
      %p93 = por %p91, %p92
      %p94 = scmp.ne.s32.totalorder %s82, %s83
      %p95 = scmp.eq.s32.totalorder %s26, 1
      %p96 = por %p94, %p95
      %p98 = scmp.ne.s32.totalorder %s83, %s97
      %p99 = scmp.eq.s32.totalorder %s26, 0
      %p100 = por %p98, %p99
      %s102 = sadd.s32 %s101, 1
      %p105 = scmp.eq.s32.totalorder %s20, 1
      %p106 = scmp.ne.s32.totalorder %s101, %s103
      %p107 = scmp.eq.s32.totalorder %s20, 0
      %p108 = por %p106, %p107
      %p109 = scmp.ne.s32.totalorder %s101, %s103
      %p110 = scmp.eq.s32.totalorder %s25, 1
      %p111 = por %p109, %p110
      %p112 = scmp.ne.s32.totalorder %s103, %s104
      %p113 = scmp.eq.s32.totalorder %s25, 0
      %p114 = por %p112, %p113
      %p115 = scmp.ne.s32.totalorder %s103, %s104
      %p116 = scmp.eq.s32.totalorder %s26, 1
      %p117 = por %p115, %p116
      %p119 = scmp.ne.s32.totalorder %s104, %s118
      %p120 = scmp.eq.s32.totalorder %s26, 0
      %p121 = por %p119, %p120
      %s122 = ssub.s32 %s20, %s27
      %p123 = scmp.eq.s32.totalorder %s122, 0
      %s125 = sadd.s32 %s124, 1
      %s126 = scalar_select %p123, %s124, %s125
      %p129 = pneg %p123
      %p130 = scmp.eq.s32.totalorder %s20, 1
      %p131 = por %p129, %p130
      %p132 = scmp.ne.s32.totalorder %s124, %s127
      %p133 = scmp.eq.s32.totalorder %s20, 0
      %p134 = por %p132, %p133
      %p135 = scmp.ne.s32.totalorder %s124, %s127
      %p136 = scmp.eq.s32.totalorder %s25, 1
      %p137 = por %p135, %p136
      %p138 = scmp.ne.s32.totalorder %s127, %s128
      %p139 = scmp.eq.s32.totalorder %s25, 0
      %p140 = por %p138, %p139
      %p141 = scmp.ne.s32.totalorder %s127, %s128
      %p142 = scmp.eq.s32.totalorder %s26, 1
      %p143 = por %p141, %p142
      %p145 = scmp.ne.s32.totalorder %s128, %s144
      %p146 = scmp.eq.s32.totalorder %s26, 0
      %p147 = por %p145, %p146
      %p148 = scmp.le.s32.totalorder 1, %s20
      %p149 = scmp.lt.s32.totalorder %s20, 3
      %p150 = pnand %p148, %p149
      %p151 = pneg %p150
      // Predicated region
      $region9: #{tpu_custom_call.1} parent=5 // pred_check
        _
      $region10: #{tpu_custom_call.1} parent=5 // pred_check_branch
        %153 = sbr.rel (%p150) target = $region12
      $region11: #{tpu_custom_call.1} parent=5 // pred_region
        %s154 = ssub.s32 %s20, 1
        // Predicated region
        $region13: #{tpu_custom_call.1} parent=11 // pred_check
          %p155 = pneg %p93
        $region14: #{tpu_custom_call.1} parent=11 // pred_check_branch
          %157 = sbr.rel (%p155) target = $region16
        $region15: #{tpu_custom_call.1} parent=11 // pred_region
          %s159 = ssub.s32 2048, 2048
          %160 = vsyncadd [#allocation6], %s159
          %s161 = sshll.u32 [#allocation7], 4
          %s162 = int_to_ptr.vmem [resolvable:$true] %s161
          %167 = dma.hbm_to_vmem [thread:$0]  %s2, 2048, %s162, [#allocation6], 128, 128, 8
        $region16: #{tpu_custom_call.1} parent=11 // pred_fallthru
          _
        // Predicated region
        $region17: #{tpu_custom_call.1} parent=11 // pred_check
          %p168 = pneg %p114
        $region18: #{tpu_custom_call.1} parent=11 // pred_check_branch
          %170 = sbr.rel (%p168) target = $region20
        $region19: #{tpu_custom_call.1} parent=11 // pred_region
          %s172 = ssub.s32 256, 256
          %173 = vsyncadd [#allocation9], %s172
          %s174 = sshll.u32 [#allocation8], 4
          %s175 = int_to_ptr.vmem [resolvable:$true] %s174
          %180 = dma.hbm_to_vmem [thread:$0]  %s3, 256, %s175, [#allocation9], 128, 128, 8
        $region20: #{tpu_custom_call.1} parent=11 // pred_fallthru
          _
      $region12: #{tpu_custom_call.1} parent=5 // pred_fallthru
        _
      %p181 = scmp.lt.s32.totalorder %s20, 2
      // Predicated region
      $region21: #{tpu_custom_call.1} parent=5 // pred_check
        %p182 = pneg %p181
      $region22: #{tpu_custom_call.1} parent=5 // pred_check_branch
        %184 = sbr.rel (%p182) target = $region24
      $region23: #{tpu_custom_call.1} parent=5 // pred_region
        // Predicated region
        $region25: #{tpu_custom_call.1} parent=23 // pred_check
          %p185 = pneg %p40
        $region26: #{tpu_custom_call.1} parent=23 // pred_check_branch
          %187 = sbr.rel (%p185) target = $region28
        $region27: #{tpu_custom_call.1} parent=23 // pred_region
          %s188 = sand.u32 %s30, 1
          %s189 = scalar_lea.sflag [#allocation3], %s188
          %s190 = sand.u32 %s30, 1
          %s191 = smul.addr %s190, 16
          %s192 = scalar_lea.vmem [#allocation2], %s191
          %s194 = ssub.s32 256, 256
          %195 = vsyncadd %s189, %s194
          %s196 = smul.addr %s20, 2
          %s197 = smul.addr %s196, 128
          %s198 = scalar_lea.hbm %s0, %s197
          %s199 = sshll.u32 %s192, 4
          %s200 = int_to_ptr.vmem [resolvable:$true] %s199
          %205 = dma.hbm_to_vmem [thread:$0]  %s198, 256, %s200, %s189, 128, 128, 8
        $region28: #{tpu_custom_call.1} parent=23 // pred_fallthru
          _
        // Predicated region
        $region29: #{tpu_custom_call.1} parent=23 // pred_check
          %p206 = pneg %p66
        $region30: #{tpu_custom_call.1} parent=23 // pred_check_branch
          %208 = sbr.rel (%p206) target = $region32
        $region31: #{tpu_custom_call.1} parent=23 // pred_region
          %s209 = sand.u32 %s20, 1
          %s210 = scalar_lea.sflag [#allocation6], %s209
          %s211 = sand.u32 %s56, 1
          %s212 = smul.addr %s211, 16
          %s213 = scalar_lea.vmem [#allocation5], %s212
          %s215 = ssub.s32 256, 256
          %216 = vsyncadd %s210, %s215
          %s217 = smul.addr %s20, 2
          %s218 = smul.addr %s217, 128
          %s219 = scalar_lea.hbm %s1, %s218
          %s220 = sshll.u32 %s213, 4
          %s221 = int_to_ptr.vmem [resolvable:$true] %s220
          %226 = dma.hbm_to_vmem [thread:$0]  %s219, 256, %s221, %s210, 128, 128, 8
        $region32: #{tpu_custom_call.1} parent=23 // pred_fallthru
          _
      $region24: #{tpu_custom_call.1} parent=5 // pred_fallthru
        _
      %p227 = scmp.le.s32.totalorder 1, %s20
      %p228 = scmp.lt.s32.totalorder %s20, 3
      %p229 = pnand %p227, %p228
      %p230 = pneg %p229
      // Predicated region
      $region33: #{tpu_custom_call.1} parent=5 // pred_check
        _
      $region34: #{tpu_custom_call.1} parent=5 // pred_check_branch
        %232 = sbr.rel (%p229) target = $region36
      $region35: #{tpu_custom_call.1} parent=5 // pred_region
        %s233 = ssub.s32 %s20, 1
        %s234 = sand.u32 %s33, 1
        %s235 = scalar_lea.sflag [#allocation3], %s234
        %s236 = sand.u32 %s33, 1
        %s237 = smul.addr %s236, 16
        %s238 = scalar_lea.vmem [#allocation2], %s237
        // Predicated region
        $region37: #{tpu_custom_call.1} parent=35 // pred_check
          %p239 = pneg %p46
        $region38: #{tpu_custom_call.1} parent=35 // pred_check_branch
          %241 = sbr.rel (%p239) target = $region40
        $region39: #{tpu_custom_call.1} parent=35 // pred_region
          %242 = dma.done %s235, 256
        $region40: #{tpu_custom_call.1} parent=35 // pred_fallthru
          _
        %s243 = sand.u32 %s25, 1
        %s244 = scalar_lea.sflag [#allocation6], %s243
        %s245 = sand.u32 %s59, 1
        %s246 = smul.addr %s245, 16
        %s247 = scalar_lea.vmem [#allocation5], %s246
        // Predicated region
        $region41: #{tpu_custom_call.1} parent=35 // pred_check
          %p248 = pneg %p72
        $region42: #{tpu_custom_call.1} parent=35 // pred_check_branch
          %250 = sbr.rel (%p248) target = $region44
        $region43: #{tpu_custom_call.1} parent=35 // pred_region
          %251 = dma.done %s244, 256
        $region44: #{tpu_custom_call.1} parent=35 // pred_fallthru
          _
        // Predicated region
        $region45: #{tpu_custom_call.1} parent=35 // pred_check
          %p252 = pneg %p93
        $region46: #{tpu_custom_call.1} parent=35 // pred_check_branch
          %254 = sbr.rel (%p252) target = $region48
        $region47: #{tpu_custom_call.1} parent=35 // pred_region
          %255 = dma.done [#allocation6], 2048
        $region48: #{tpu_custom_call.1} parent=35 // pred_fallthru
          _
        // Predicated region
        $region49: #{tpu_custom_call.1} parent=35 // pred_check
          %p256 = pneg %p114
        $region50: #{tpu_custom_call.1} parent=35 // pred_check_branch
          %258 = sbr.rel (%p256) target = $region52
        $region51: #{tpu_custom_call.1} parent=35 // pred_region
          %259 = dma.done [#allocation9], 256
        $region52: #{tpu_custom_call.1} parent=35 // pred_fallthru
          _
        %s260 = sand.u32 %s33, 1
        %s261 = scalar_lea.sflag [#allocation3], %s260
        %s262 = sand.u32 %s33, 1
        %s263 = smul.addr %s262, 16
        %s264 = scalar_lea.vmem [#allocation2], %s263
        %p265 = pneg %p46
        %p266 = pneg %p43
        %s267 = sand.u32 %s25, 1
        %s268 = scalar_lea.sflag [#allocation6], %s267
        %s269 = sand.u32 %s59, 1
        %s270 = smul.addr %s269, 16
        %s271 = scalar_lea.vmem [#allocation5], %s270
        %p272 = pneg %p72
        %p273 = pneg %p69
        %p274 = pneg %p93
        %p275 = pneg %p90
        %p276 = pneg %p114
        %p277 = pneg %p111
        %p278 = pneg %p140
        %p279 = pneg %p137
        %s280 = sand.u32 %s127, 1
        %s281 = scalar_lea.sflag [#allocation4], %s280
        %s282 = sand.u32 %s127, 1
        %s283 = smul.addr %s282, 8
        %s284 = scalar_lea.vmem [#allocation10], %s283
        %v285 = vld [vmem:[%s238] sm:$0xff]
        %v286 = vld [vmem:[%s238 + $0x8] sm:$0xff]
        %v287 = vld [vmem:[%s247] sm:$0xff]
        %v288 = vld [vmem:[%s247 + $0x8] sm:$0xff]
        %v289 = vld [vmem:[#allocation7] sm:$0xff]
        %v290 = vld [vmem:[#allocation7 + $0x8] sm:$0xff]
        %v291 = vld [vmem:[#allocation7 + $0x10] sm:$0xff]
        %v292 = vld [vmem:[#allocation7 + $0x18] sm:$0xff]
        %v293 = vld [vmem:[#allocation7 + $0x20] sm:$0xff]
        %v294 = vld [vmem:[#allocation7 + $0x28] sm:$0xff]
        %v295 = vld [vmem:[#allocation7 + $0x30] sm:$0xff]
        %v296 = vld [vmem:[#allocation7 + $0x38] sm:$0xff]
        %v297 = vld [vmem:[#allocation7 + $0x40] sm:$0xff]
        %v298 = vld [vmem:[#allocation7 + $0x48] sm:$0xff]
        %v299 = vld [vmem:[#allocation7 + $0x50] sm:$0xff]
        %v300 = vld [vmem:[#allocation7 + $0x58] sm:$0xff]
        %v301 = vld [vmem:[#allocation7 + $0x60] sm:$0xff]
        %v302 = vld [vmem:[#allocation7 + $0x68] sm:$0xff]
        %v303 = vld [vmem:[#allocation7 + $0x70] sm:$0xff]
        %v304 = vld [vmem:[#allocation7 + $0x78] sm:$0xff]
        %v305 = vld [vmem:[#allocation8] sm:$0xff]
        %v306 = vld [vmem:[#allocation8 + $0x8] sm:$0xff]
        %307 = vmatprep.subr.mxu0 0.0
        %308 = vmatpush1.msra.mxu0 %v304
        %309 = vmatprep.subr.mxu0 0.0
        %310 = vmatpush1.msra.mxu0 %v303
        %311 = vmatprep.subr.mxu0 0.0
        %312 = vmatpush1.msra.mxu0 %v302
        %313 = vmatprep.subr.mxu0 0.0
        %314 = vmatpush1.msra.mxu0 %v301
        %315 = vmatprep.subr.mxu0 0.0
        %316 = vmatpush1.msra.mxu0 %v300
        %317 = vmatprep.subr.mxu0 0.0
        %318 = vmatpush1.msra.mxu0 %v299
        %319 = vmatprep.subr.mxu0 0.0
        %320 = vmatpush1.msra.mxu0 %v298
        %321 = vmatprep.subr.mxu0 0.0
        %322 = vmatpush1.msra.mxu0 %v297
        %323 = vmatprep.subr.mxu0 0.0
        %324 = vmatpush1.msra.mxu0 %v296
        %325 = vmatprep.subr.mxu0 0.0
        %326 = vmatpush1.msra.mxu0 %v295
        %327 = vmatprep.subr.mxu0 0.0
        %328 = vmatpush1.msra.mxu0 %v294
        %329 = vmatprep.subr.mxu0 0.0
        %330 = vmatpush1.msra.mxu0 %v293
        %331 = vmatprep.subr.mxu0 0.0
        %332 = vmatpush1.msra.mxu0 %v292
        %333 = vmatprep.subr.mxu0 0.0
        %334 = vmatpush1.msra.mxu0 %v291
        %335 = vmatprep.subr.mxu0 0.0
        %336 = vmatpush1.msra.mxu0 %v290
        %337 = vmatprep.subr.mxu0 0.0
        %338 = vmatpush1.msra.mxu0 %v289
        %339 = vmatprep.subr.mxu0 0.0
        %340 = vmatpush2.msra.mxu0 0.0
        %341 = vmatprep.subr.mxu0 0.0
        %342 = vmatpush2.msra.mxu0 0.0
        %343 = vmatprep.subr.mxu0 0.0
        %344 = vmatpush2.msra.mxu0 0.0
        %345 = vmatprep.subr.mxu0 0.0
        %346 = vmatpush2.msra.mxu0 0.0
        %347 = vmatprep.subr.mxu0 0.0
        %348 = vmatpush2.msra.mxu0 0.0
        %349 = vmatprep.subr.mxu0 0.0
        %350 = vmatpush2.msra.mxu0 0.0
        %351 = vmatprep.subr.mxu0 0.0
        %352 = vmatpush2.msra.mxu0 0.0
        %353 = vmatprep.subr.mxu0 0.0
        %354 = vmatpush2.msra.mxu0 0.0
        %355 = vmatprep.subr.mxu0 0.0
        %356 = vmatpush2.msra.mxu0 0.0
        %357 = vmatprep.subr.mxu0 0.0
        %358 = vmatpush2.msra.mxu0 0.0
        %359 = vmatprep.subr.mxu0 0.0
        %360 = vmatpush2.msra.mxu0 0.0
        %361 = vmatprep.subr.mxu0 0.0
        %362 = vmatpush2.msra.mxu0 0.0
        %363 = vmatprep.subr.mxu0 0.0
        %364 = vmatpush2.msra.mxu0 0.0
        %365 = vmatprep.subr.mxu0 0.0
        %366 = vmatpush2.msra.mxu0 0.0
        %367 = vmatprep.subr.mxu0 0.0
        %368 = vmatpush2.msra.mxu0 0.0
        %369 = vmatprep.subr.mxu0 0.0
        %370 = vmatpush2.msra.mxu0 0.0
        %371 = vmatprep.mubr.f32.mxu0 0.0
        %372 = vmatmul.mubr.f32.gmra.mxu0 %v285
        %v373 = vpop.f32.mrf.mxu0
        %v374 = vadd.f32 0.0, %v373
        %v375 = vpop.f32.mrf.mxu0
        %376 = vmatprep.mubr.f32.mxu0 0.0
        %377 = vmatmul.mubr.f32.gmra.mxu0 %v286
        %v378 = vpop.f32.mrf.mxu0
        %v379 = vadd.f32 0.0, %v378
        %v380 = vpop.f32.mrf.mxu0
        %381 = vdwg.mxu0
        %vm382 = vcmask 130048
        %v384 = vsel %vm382, %v305, 0
        %v387 = vsel %vm382, %v306, 0
        %389 = vmatprep.subr.mxu0 0.0
        %390 = vmatpush1.msra.mxu0 0.0
        %391 = vmatprep.subr.mxu0 0.0
        %392 = vmatpush1.msra.mxu0 0.0
        %393 = vmatprep.subr.mxu0 0.0
        %394 = vmatpush1.msra.mxu0 0.0
        %395 = vmatprep.subr.mxu0 0.0
        %396 = vmatpush1.msra.mxu0 0.0
        %397 = vmatprep.subr.mxu0 0.0
        %398 = vmatpush1.msra.mxu0 0.0
        %399 = vmatprep.subr.mxu0 0.0
        %400 = vmatpush1.msra.mxu0 0.0
        %401 = vmatprep.subr.mxu0 0.0
        %402 = vmatpush1.msra.mxu0 0.0
        %403 = vmatprep.subr.mxu0 0.0
        %404 = vmatpush1.msra.mxu0 0.0
        %405 = vmatprep.subr.mxu0 0.0
        %406 = vmatpush1.msra.mxu0 0.0
        %407 = vmatprep.subr.mxu0 0.0
        %408 = vmatpush1.msra.mxu0 0.0
        %409 = vmatprep.subr.mxu0 0.0
        %410 = vmatpush1.msra.mxu0 0.0
        %411 = vmatprep.subr.mxu0 0.0
        %412 = vmatpush1.msra.mxu0 0.0
        %413 = vmatprep.subr.mxu0 0.0
        %414 = vmatpush1.msra.mxu0 0.0
        %415 = vmatprep.subr.mxu0 0.0
        %416 = vmatpush1.msra.mxu0 0.0
        %417 = vmatprep.subr.mxu0 0.0
        %418 = vmatpush1.msra.mxu0 %v379
        %419 = vmatprep.subr.mxu0 0.0
        %420 = vmatpush1.msra.mxu0 %v374
        %421 = vmatprep.subr.mxu0 0.0
        %422 = vmatpush2.msra.mxu0 0.0
        %423 = vmatprep.subr.mxu0 0.0
        %424 = vmatpush2.msra.mxu0 0.0
        %425 = vmatprep.subr.mxu0 0.0
        %426 = vmatpush2.msra.mxu0 0.0
        %427 = vmatprep.subr.mxu0 0.0
        %428 = vmatpush2.msra.mxu0 0.0
        %429 = vmatprep.subr.mxu0 0.0
        %430 = vmatpush2.msra.mxu0 0.0
        %431 = vmatprep.subr.mxu0 0.0
        %432 = vmatpush2.msra.mxu0 0.0
        %433 = vmatprep.subr.mxu0 0.0
        %434 = vmatpush2.msra.mxu0 0.0
        %435 = vmatprep.subr.mxu0 0.0
        %436 = vmatpush2.msra.mxu0 0.0
        %437 = vmatprep.subr.mxu0 0.0
        %438 = vmatpush2.msra.mxu0 0.0
        %439 = vmatprep.subr.mxu0 0.0
        %440 = vmatpush2.msra.mxu0 0.0
        %441 = vmatprep.subr.mxu0 0.0
        %442 = vmatpush2.msra.mxu0 0.0
        %443 = vmatprep.subr.mxu0 0.0
        %444 = vmatpush2.msra.mxu0 0.0
        %445 = vmatprep.subr.mxu0 0.0
        %446 = vmatpush2.msra.mxu0 0.0
        %447 = vmatprep.subr.mxu0 0.0
        %448 = vmatpush2.msra.mxu0 0.0
        %449 = vmatprep.subr.mxu0 0.0
        %450 = vmatpush2.msra.mxu0 0.0
        %451 = vmatprep.subr.mxu0 0.0
        %452 = vmatpush2.msra.mxu0 0.0
        %453 = vmatprep.mubr.f32.mxu0 0.0
        %454 = vmatmul.mubr.f32.gmra.mxu0 %v384
        %v455 = vpop.f32.mrf.mxu0
        %v456 = vadd.f32 0.0, %v455
        %v457 = vpop.f32.mrf.mxu0
        %458 = vmatprep.mubr.f32.mxu0 0.0
        %459 = vmatmul.mubr.f32.gmra.mxu0 %v387
        %v460 = vpop.f32.mrf.mxu0
        %v461 = vadd.f32 0.0, %v460
        %v462 = vpop.f32.mrf.mxu0
        %463 = vdwg.mxu0
        %464 = vmatprep.subr.mxu0 0.0
        %465 = vmatpush1.msra.mxu0 %v304
        %466 = vmatprep.subr.mxu0 0.0
        %467 = vmatpush1.msra.mxu0 %v303
        %468 = vmatprep.subr.mxu0 0.0
        %469 = vmatpush1.msra.mxu0 %v302
        %470 = vmatprep.subr.mxu0 0.0
        %471 = vmatpush1.msra.mxu0 %v301
        %472 = vmatprep.subr.mxu0 0.0
        %473 = vmatpush1.msra.mxu0 %v300
        %474 = vmatprep.subr.mxu0 0.0
        %475 = vmatpush1.msra.mxu0 %v299
        %476 = vmatprep.subr.mxu0 0.0
        %477 = vmatpush1.msra.mxu0 %v298
        %478 = vmatprep.subr.mxu0 0.0
        %479 = vmatpush1.msra.mxu0 %v297
        %480 = vmatprep.subr.mxu0 0.0
        %481 = vmatpush1.msra.mxu0 %v296
        %482 = vmatprep.subr.mxu0 0.0
        %483 = vmatpush1.msra.mxu0 %v295
        %484 = vmatprep.subr.mxu0 0.0
        %485 = vmatpush1.msra.mxu0 %v294
        %486 = vmatprep.subr.mxu0 0.0
        %487 = vmatpush1.msra.mxu0 %v293
        %488 = vmatprep.subr.mxu0 0.0
        %489 = vmatpush1.msra.mxu0 %v292
        %490 = vmatprep.subr.mxu0 0.0
        %491 = vmatpush1.msra.mxu0 %v291
        %492 = vmatprep.subr.mxu0 0.0
        %493 = vmatpush1.msra.mxu0 %v290
        %494 = vmatprep.subr.mxu0 0.0
        %495 = vmatpush1.msra.mxu0 %v289
        %496 = vmatprep.subr.mxu0 0.0
        %497 = vmatpush2.msra.mxu0 0.0
        %498 = vmatprep.subr.mxu0 0.0
        %499 = vmatpush2.msra.mxu0 0.0
        %500 = vmatprep.subr.mxu0 0.0
        %501 = vmatpush2.msra.mxu0 0.0
        %502 = vmatprep.subr.mxu0 0.0
        %503 = vmatpush2.msra.mxu0 0.0
        %504 = vmatprep.subr.mxu0 0.0
        %505 = vmatpush2.msra.mxu0 0.0
        %506 = vmatprep.subr.mxu0 0.0
        %507 = vmatpush2.msra.mxu0 0.0
        %508 = vmatprep.subr.mxu0 0.0
        %509 = vmatpush2.msra.mxu0 0.0
        %510 = vmatprep.subr.mxu0 0.0
        %511 = vmatpush2.msra.mxu0 0.0
        %512 = vmatprep.subr.mxu0 0.0
        %513 = vmatpush2.msra.mxu0 0.0
        %514 = vmatprep.subr.mxu0 0.0
        %515 = vmatpush2.msra.mxu0 0.0
        %516 = vmatprep.subr.mxu0 0.0
        %517 = vmatpush2.msra.mxu0 0.0
        %518 = vmatprep.subr.mxu0 0.0
        %519 = vmatpush2.msra.mxu0 0.0
        %520 = vmatprep.subr.mxu0 0.0
        %521 = vmatpush2.msra.mxu0 0.0
        %522 = vmatprep.subr.mxu0 0.0
        %523 = vmatpush2.msra.mxu0 0.0
        %524 = vmatprep.subr.mxu0 0.0
        %525 = vmatpush2.msra.mxu0 0.0
        %526 = vmatprep.subr.mxu0 0.0
        %527 = vmatpush2.msra.mxu0 0.0
        %528 = vmatprep.mubr.f32.mxu0 0.0
        %529 = vmatmul.mubr.f32.gmra.mxu0 %v287
        %v530 = vpop.f32.mrf.mxu0
        %v531 = vadd.f32 0.0, %v530
        %v532 = vpop.f32.mrf.mxu0
        %533 = vmatprep.mubr.f32.mxu0 0.0
        %534 = vmatmul.mubr.f32.gmra.mxu0 %v288
        %v535 = vpop.f32.mrf.mxu0
        %v536 = vadd.f32 0.0, %v535
        %v537 = vpop.f32.mrf.mxu0
        %538 = vdwg.mxu0
        %539 = vmatprep.subr.mxu0 0.0
        %540 = vmatpush1.msra.mxu0 0.0
        %541 = vmatprep.subr.mxu0 0.0
        %542 = vmatpush1.msra.mxu0 0.0
        %543 = vmatprep.subr.mxu0 0.0
        %544 = vmatpush1.msra.mxu0 0.0
        %545 = vmatprep.subr.mxu0 0.0
        %546 = vmatpush1.msra.mxu0 0.0
        %547 = vmatprep.subr.mxu0 0.0
        %548 = vmatpush1.msra.mxu0 0.0
        %549 = vmatprep.subr.mxu0 0.0
        %550 = vmatpush1.msra.mxu0 0.0
        %551 = vmatprep.subr.mxu0 0.0
        %552 = vmatpush1.msra.mxu0 0.0
        %553 = vmatprep.subr.mxu0 0.0
        %554 = vmatpush1.msra.mxu0 0.0
        %555 = vmatprep.subr.mxu0 0.0
        %556 = vmatpush1.msra.mxu0 0.0
        %557 = vmatprep.subr.mxu0 0.0
        %558 = vmatpush1.msra.mxu0 0.0
        %559 = vmatprep.subr.mxu0 0.0
        %560 = vmatpush1.msra.mxu0 0.0
        %561 = vmatprep.subr.mxu0 0.0
        %562 = vmatpush1.msra.mxu0 0.0
        %563 = vmatprep.subr.mxu0 0.0
        %564 = vmatpush1.msra.mxu0 0.0
        %565 = vmatprep.subr.mxu0 0.0
        %566 = vmatpush1.msra.mxu0 0.0
        %567 = vmatprep.subr.mxu0 0.0
        %568 = vmatpush1.msra.mxu0 %v536
        %569 = vmatprep.subr.mxu0 0.0
        %570 = vmatpush1.msra.mxu0 %v531
        %571 = vmatprep.subr.mxu0 0.0
        %572 = vmatpush2.msra.mxu0 0.0
        %573 = vmatprep.subr.mxu0 0.0
        %574 = vmatpush2.msra.mxu0 0.0
        %575 = vmatprep.subr.mxu0 0.0
        %576 = vmatpush2.msra.mxu0 0.0
        %577 = vmatprep.subr.mxu0 0.0
        %578 = vmatpush2.msra.mxu0 0.0
        %579 = vmatprep.subr.mxu0 0.0
        %580 = vmatpush2.msra.mxu0 0.0
        %581 = vmatprep.subr.mxu0 0.0
        %582 = vmatpush2.msra.mxu0 0.0
        %583 = vmatprep.subr.mxu0 0.0
        %584 = vmatpush2.msra.mxu0 0.0
        %585 = vmatprep.subr.mxu0 0.0
        %586 = vmatpush2.msra.mxu0 0.0
        %587 = vmatprep.subr.mxu0 0.0
        %588 = vmatpush2.msra.mxu0 0.0
        %589 = vmatprep.subr.mxu0 0.0
        %590 = vmatpush2.msra.mxu0 0.0
        %591 = vmatprep.subr.mxu0 0.0
        %592 = vmatpush2.msra.mxu0 0.0
        %593 = vmatprep.subr.mxu0 0.0
        %594 = vmatpush2.msra.mxu0 0.0
        %595 = vmatprep.subr.mxu0 0.0
        %596 = vmatpush2.msra.mxu0 0.0
        %597 = vmatprep.subr.mxu0 0.0
        %598 = vmatpush2.msra.mxu0 0.0
        %599 = vmatprep.subr.mxu0 0.0
        %600 = vmatpush2.msra.mxu0 0.0
        %601 = vmatprep.subr.mxu0 0.0
        %602 = vmatpush2.msra.mxu0 0.0
        %603 = vmatprep.mubr.f32.mxu0 0.0
        %604 = vmatmul.mubr.f32.gmra.mxu0 %v384
        %v605 = vpop.f32.mrf.mxu0
        %v606 = vadd.f32 0.0, %v605
        %v607 = vpop.f32.mrf.mxu0
        %608 = vmatprep.mubr.f32.mxu0 0.0
        %609 = vmatmul.mubr.f32.gmra.mxu0 %v387
        %v610 = vpop.f32.mrf.mxu0
        %v611 = vadd.f32 0.0, %v610
        %v612 = vpop.f32.mrf.mxu0
        %613 = vdwg.mxu0
        %v614 = vmul.f32 %v285, %v285
        %v615 = vmul.f32 %v286, %v286
        %616 = vmatprep.subr.mxu0 0.0
        %617 = vmatpush1.msra.mxu0 %v304
        %618 = vmatprep.subr.mxu0 0.0
        %619 = vmatpush1.msra.mxu0 %v303
        %620 = vmatprep.subr.mxu0 0.0
        %621 = vmatpush1.msra.mxu0 %v302
        %622 = vmatprep.subr.mxu0 0.0
        %623 = vmatpush1.msra.mxu0 %v301
        %624 = vmatprep.subr.mxu0 0.0
        %625 = vmatpush1.msra.mxu0 %v300
        %626 = vmatprep.subr.mxu0 0.0
        %627 = vmatpush1.msra.mxu0 %v299
        %628 = vmatprep.subr.mxu0 0.0
        %629 = vmatpush1.msra.mxu0 %v298
        %630 = vmatprep.subr.mxu0 0.0
        %631 = vmatpush1.msra.mxu0 %v297
        %632 = vmatprep.subr.mxu0 0.0
        %633 = vmatpush1.msra.mxu0 %v296
        %634 = vmatprep.subr.mxu0 0.0
        %635 = vmatpush1.msra.mxu0 %v295
        %636 = vmatprep.subr.mxu0 0.0
        %637 = vmatpush1.msra.mxu0 %v294
        %638 = vmatprep.subr.mxu0 0.0
        %639 = vmatpush1.msra.mxu0 %v293
        %640 = vmatprep.subr.mxu0 0.0
        %641 = vmatpush1.msra.mxu0 %v292
        %642 = vmatprep.subr.mxu0 0.0
        %643 = vmatpush1.msra.mxu0 %v291
        %644 = vmatprep.subr.mxu0 0.0
        %645 = vmatpush1.msra.mxu0 %v290
        %646 = vmatprep.subr.mxu0 0.0
        %647 = vmatpush1.msra.mxu0 %v289
        %648 = vmatprep.subr.mxu0 0.0
        %649 = vmatpush2.msra.mxu0 0.0
        %650 = vmatprep.subr.mxu0 0.0
        %651 = vmatpush2.msra.mxu0 0.0
        %652 = vmatprep.subr.mxu0 0.0
        %653 = vmatpush2.msra.mxu0 0.0
        %654 = vmatprep.subr.mxu0 0.0
        %655 = vmatpush2.msra.mxu0 0.0
        %656 = vmatprep.subr.mxu0 0.0
        %657 = vmatpush2.msra.mxu0 0.0
        %658 = vmatprep.subr.mxu0 0.0
        %659 = vmatpush2.msra.mxu0 0.0
        %660 = vmatprep.subr.mxu0 0.0
        %661 = vmatpush2.msra.mxu0 0.0
        %662 = vmatprep.subr.mxu0 0.0
        %663 = vmatpush2.msra.mxu0 0.0
        %664 = vmatprep.subr.mxu0 0.0
        %665 = vmatpush2.msra.mxu0 0.0
        %666 = vmatprep.subr.mxu0 0.0
        %667 = vmatpush2.msra.mxu0 0.0
        %668 = vmatprep.subr.mxu0 0.0
        %669 = vmatpush2.msra.mxu0 0.0
        %670 = vmatprep.subr.mxu0 0.0
        %671 = vmatpush2.msra.mxu0 0.0
        %672 = vmatprep.subr.mxu0 0.0
        %673 = vmatpush2.msra.mxu0 0.0
        %674 = vmatprep.subr.mxu0 0.0
        %675 = vmatpush2.msra.mxu0 0.0
        %676 = vmatprep.subr.mxu0 0.0
        %677 = vmatpush2.msra.mxu0 0.0
        %678 = vmatprep.subr.mxu0 0.0
        %679 = vmatpush2.msra.mxu0 0.0
        %680 = vmatprep.mubr.f32.mxu0 0.0
        %681 = vmatmul.mubr.f32.gmra.mxu0 %v614
        %v682 = vpop.f32.mrf.mxu0
        %v683 = vadd.f32 0.0, %v682
        %v684 = vpop.f32.mrf.mxu0
        %685 = vmatprep.mubr.f32.mxu0 0.0
        %686 = vmatmul.mubr.f32.gmra.mxu0 %v615
        %v687 = vpop.f32.mrf.mxu0
        %v688 = vadd.f32 0.0, %v687
        %v689 = vpop.f32.mrf.mxu0
        %690 = vdwg.mxu0
        %691 = vmatprep.subr.mxu0 0.0
        %692 = vmatpush1.msra.mxu0 0.0
        %693 = vmatprep.subr.mxu0 0.0
        %694 = vmatpush1.msra.mxu0 0.0
        %695 = vmatprep.subr.mxu0 0.0
        %696 = vmatpush1.msra.mxu0 0.0
        %697 = vmatprep.subr.mxu0 0.0
        %698 = vmatpush1.msra.mxu0 0.0
        %699 = vmatprep.subr.mxu0 0.0
        %700 = vmatpush1.msra.mxu0 0.0
        %701 = vmatprep.subr.mxu0 0.0
        %702 = vmatpush1.msra.mxu0 0.0
        %703 = vmatprep.subr.mxu0 0.0
        %704 = vmatpush1.msra.mxu0 0.0
        %705 = vmatprep.subr.mxu0 0.0
        %706 = vmatpush1.msra.mxu0 0.0
        %707 = vmatprep.subr.mxu0 0.0
        %708 = vmatpush1.msra.mxu0 0.0
        %709 = vmatprep.subr.mxu0 0.0
        %710 = vmatpush1.msra.mxu0 0.0
        %711 = vmatprep.subr.mxu0 0.0
        %712 = vmatpush1.msra.mxu0 0.0
        %713 = vmatprep.subr.mxu0 0.0
        %714 = vmatpush1.msra.mxu0 0.0
        %715 = vmatprep.subr.mxu0 0.0
        %716 = vmatpush1.msra.mxu0 0.0
        %717 = vmatprep.subr.mxu0 0.0
        %718 = vmatpush1.msra.mxu0 0.0
        %719 = vmatprep.subr.mxu0 0.0
        %720 = vmatpush1.msra.mxu0 %v688
        %721 = vmatprep.subr.mxu0 0.0
        %722 = vmatpush1.msra.mxu0 %v683
        %723 = vmatprep.subr.mxu0 0.0
        %724 = vmatpush2.msra.mxu0 0.0
        %725 = vmatprep.subr.mxu0 0.0
        %726 = vmatpush2.msra.mxu0 0.0
        %727 = vmatprep.subr.mxu0 0.0
        %728 = vmatpush2.msra.mxu0 0.0
        %729 = vmatprep.subr.mxu0 0.0
        %730 = vmatpush2.msra.mxu0 0.0
        %731 = vmatprep.subr.mxu0 0.0
        %732 = vmatpush2.msra.mxu0 0.0
        %733 = vmatprep.subr.mxu0 0.0
        %734 = vmatpush2.msra.mxu0 0.0
        %735 = vmatprep.subr.mxu0 0.0
        %736 = vmatpush2.msra.mxu0 0.0
        %737 = vmatprep.subr.mxu0 0.0
        %738 = vmatpush2.msra.mxu0 0.0
        %739 = vmatprep.subr.mxu0 0.0
        %740 = vmatpush2.msra.mxu0 0.0
        %741 = vmatprep.subr.mxu0 0.0
        %742 = vmatpush2.msra.mxu0 0.0
        %743 = vmatprep.subr.mxu0 0.0
        %744 = vmatpush2.msra.mxu0 0.0
        %745 = vmatprep.subr.mxu0 0.0
        %746 = vmatpush2.msra.mxu0 0.0
        %747 = vmatprep.subr.mxu0 0.0
        %748 = vmatpush2.msra.mxu0 0.0
        %749 = vmatprep.subr.mxu0 0.0
        %750 = vmatpush2.msra.mxu0 0.0
        %751 = vmatprep.subr.mxu0 0.0
        %752 = vmatpush2.msra.mxu0 0.0
        %753 = vmatprep.subr.mxu0 0.0
        %754 = vmatpush2.msra.mxu0 0.0
        %755 = vmatprep.mubr.f32.mxu0 0.0
        %756 = vmatmul.mubr.f32.gmra.mxu0 %v384
        %v757 = vpop.f32.mrf.mxu0
        %v758 = vadd.f32 0.0, %v757
        %v759 = vpop.f32.mrf.mxu0
        %760 = vmatprep.mubr.f32.mxu0 0.0
        %761 = vmatmul.mubr.f32.gmra.mxu0 %v387
        %v762 = vpop.f32.mrf.mxu0
        %v763 = vadd.f32 0.0, %v762
        %v764 = vpop.f32.mrf.mxu0
        %765 = vdwg.mxu0
        %v766 = vmul.f32 %v287, %v287
        %v767 = vmul.f32 %v288, %v288
        %768 = vmatprep.subr.mxu0 0.0
        %769 = vmatpush1.msra.mxu0 %v304
        %770 = vmatprep.subr.mxu0 0.0
        %771 = vmatpush1.msra.mxu0 %v303
        %772 = vmatprep.subr.mxu0 0.0
        %773 = vmatpush1.msra.mxu0 %v302
        %774 = vmatprep.subr.mxu0 0.0
        %775 = vmatpush1.msra.mxu0 %v301
        %776 = vmatprep.subr.mxu0 0.0
        %777 = vmatpush1.msra.mxu0 %v300
        %778 = vmatprep.subr.mxu0 0.0
        %779 = vmatpush1.msra.mxu0 %v299
        %780 = vmatprep.subr.mxu0 0.0
        %781 = vmatpush1.msra.mxu0 %v298
        %782 = vmatprep.subr.mxu0 0.0
        %783 = vmatpush1.msra.mxu0 %v297
        %784 = vmatprep.subr.mxu0 0.0
        %785 = vmatpush1.msra.mxu0 %v296
        %786 = vmatprep.subr.mxu0 0.0
        %787 = vmatpush1.msra.mxu0 %v295
        %788 = vmatprep.subr.mxu0 0.0
        %789 = vmatpush1.msra.mxu0 %v294
        %790 = vmatprep.subr.mxu0 0.0
        %791 = vmatpush1.msra.mxu0 %v293
        %792 = vmatprep.subr.mxu0 0.0
        %793 = vmatpush1.msra.mxu0 %v292
        %794 = vmatprep.subr.mxu0 0.0
        %795 = vmatpush1.msra.mxu0 %v291
        %796 = vmatprep.subr.mxu0 0.0
        %797 = vmatpush1.msra.mxu0 %v290
        %798 = vmatprep.subr.mxu0 0.0
        %799 = vmatpush1.msra.mxu0 %v289
        %800 = vmatprep.subr.mxu0 0.0
        %801 = vmatpush2.msra.mxu0 0.0
        %802 = vmatprep.subr.mxu0 0.0
        %803 = vmatpush2.msra.mxu0 0.0
        %804 = vmatprep.subr.mxu0 0.0
        %805 = vmatpush2.msra.mxu0 0.0
        %806 = vmatprep.subr.mxu0 0.0
        %807 = vmatpush2.msra.mxu0 0.0
        %808 = vmatprep.subr.mxu0 0.0
        %809 = vmatpush2.msra.mxu0 0.0
        %810 = vmatprep.subr.mxu0 0.0
        %811 = vmatpush2.msra.mxu0 0.0
        %812 = vmatprep.subr.mxu0 0.0
        %813 = vmatpush2.msra.mxu0 0.0
        %814 = vmatprep.subr.mxu0 0.0
        %815 = vmatpush2.msra.mxu0 0.0
        %816 = vmatprep.subr.mxu0 0.0
        %817 = vmatpush2.msra.mxu0 0.0
        %818 = vmatprep.subr.mxu0 0.0
        %819 = vmatpush2.msra.mxu0 0.0
        %820 = vmatprep.subr.mxu0 0.0
        %821 = vmatpush2.msra.mxu0 0.0
        %822 = vmatprep.subr.mxu0 0.0
        %823 = vmatpush2.msra.mxu0 0.0
        %824 = vmatprep.subr.mxu0 0.0
        %825 = vmatpush2.msra.mxu0 0.0
        %826 = vmatprep.subr.mxu0 0.0
        %827 = vmatpush2.msra.mxu0 0.0
        %828 = vmatprep.subr.mxu0 0.0
        %829 = vmatpush2.msra.mxu0 0.0
        %830 = vmatprep.subr.mxu0 0.0
        %831 = vmatpush2.msra.mxu0 0.0
        %832 = vmatprep.mubr.f32.mxu0 0.0
        %833 = vmatmul.mubr.f32.gmra.mxu0 %v766
        %v834 = vpop.f32.mrf.mxu0
        %v835 = vadd.f32 0.0, %v834
        %v836 = vpop.f32.mrf.mxu0
        %837 = vmatprep.mubr.f32.mxu0 0.0
        %838 = vmatmul.mubr.f32.gmra.mxu0 %v767
        %v839 = vpop.f32.mrf.mxu0
        %v840 = vadd.f32 0.0, %v839
        %v841 = vpop.f32.mrf.mxu0
        %842 = vdwg.mxu0
        %843 = vmatprep.subr.mxu0 0.0
        %844 = vmatpush1.msra.mxu0 0.0
        %845 = vmatprep.subr.mxu0 0.0
        %846 = vmatpush1.msra.mxu0 0.0
        %847 = vmatprep.subr.mxu0 0.0
        %848 = vmatpush1.msra.mxu0 0.0
        %849 = vmatprep.subr.mxu0 0.0
        %850 = vmatpush1.msra.mxu0 0.0
        %851 = vmatprep.subr.mxu0 0.0
        %852 = vmatpush1.msra.mxu0 0.0
        %853 = vmatprep.subr.mxu0 0.0
        %854 = vmatpush1.msra.mxu0 0.0
        %855 = vmatprep.subr.mxu0 0.0
        %856 = vmatpush1.msra.mxu0 0.0
        %857 = vmatprep.subr.mxu0 0.0
        %858 = vmatpush1.msra.mxu0 0.0
        %859 = vmatprep.subr.mxu0 0.0
        %860 = vmatpush1.msra.mxu0 0.0
        %861 = vmatprep.subr.mxu0 0.0
        %862 = vmatpush1.msra.mxu0 0.0
        %863 = vmatprep.subr.mxu0 0.0
        %864 = vmatpush1.msra.mxu0 0.0
        %865 = vmatprep.subr.mxu0 0.0
        %866 = vmatpush1.msra.mxu0 0.0
        %867 = vmatprep.subr.mxu0 0.0
        %868 = vmatpush1.msra.mxu0 0.0
        %869 = vmatprep.subr.mxu0 0.0
        %870 = vmatpush1.msra.mxu0 0.0
        %871 = vmatprep.subr.mxu0 0.0
        %872 = vmatpush1.msra.mxu0 %v840
        %873 = vmatprep.subr.mxu0 0.0
        %874 = vmatpush1.msra.mxu0 %v835
        %875 = vmatprep.subr.mxu0 0.0
        %876 = vmatpush2.msra.mxu0 0.0
        %877 = vmatprep.subr.mxu0 0.0
        %878 = vmatpush2.msra.mxu0 0.0
        %879 = vmatprep.subr.mxu0 0.0
        %880 = vmatpush2.msra.mxu0 0.0
        %881 = vmatprep.subr.mxu0 0.0
        %882 = vmatpush2.msra.mxu0 0.0
        %883 = vmatprep.subr.mxu0 0.0
        %884 = vmatpush2.msra.mxu0 0.0
        %885 = vmatprep.subr.mxu0 0.0
        %886 = vmatpush2.msra.mxu0 0.0
        %887 = vmatprep.subr.mxu0 0.0
        %888 = vmatpush2.msra.mxu0 0.0
        %889 = vmatprep.subr.mxu0 0.0
        %890 = vmatpush2.msra.mxu0 0.0
        %891 = vmatprep.subr.mxu0 0.0
        %892 = vmatpush2.msra.mxu0 0.0
        %893 = vmatprep.subr.mxu0 0.0
        %894 = vmatpush2.msra.mxu0 0.0
        %895 = vmatprep.subr.mxu0 0.0
        %896 = vmatpush2.msra.mxu0 0.0
        %897 = vmatprep.subr.mxu0 0.0
        %898 = vmatpush2.msra.mxu0 0.0
        %899 = vmatprep.subr.mxu0 0.0
        %900 = vmatpush2.msra.mxu0 0.0
        %901 = vmatprep.subr.mxu0 0.0
        %902 = vmatpush2.msra.mxu0 0.0
        %903 = vmatprep.subr.mxu0 0.0
        %904 = vmatpush2.msra.mxu0 0.0
        %905 = vmatprep.subr.mxu0 0.0
        %906 = vmatpush2.msra.mxu0 0.0
        %907 = vmatprep.mubr.f32.mxu0 0.0
        %908 = vmatmul.mubr.f32.gmra.mxu0 %v384
        %v909 = vpop.f32.mrf.mxu0
        %v910 = vadd.f32 0.0, %v909
        %v911 = vpop.f32.mrf.mxu0
        %912 = vmatprep.mubr.f32.mxu0 0.0
        %913 = vmatmul.mubr.f32.gmra.mxu0 %v387
        %v914 = vpop.f32.mrf.mxu0
        %v915 = vadd.f32 0.0, %v914
        %v916 = vpop.f32.mrf.mxu0
        %917 = vdwg.mxu0
        %v918 = vmul.f32 %v285, %v287
        %v919 = vmul.f32 %v286, %v288
        %920 = vmatprep.subr.mxu0 0.0
        %921 = vmatpush1.msra.mxu0 %v304
        %922 = vmatprep.subr.mxu0 0.0
        %923 = vmatpush1.msra.mxu0 %v303
        %924 = vmatprep.subr.mxu0 0.0
        %925 = vmatpush1.msra.mxu0 %v302
        %926 = vmatprep.subr.mxu0 0.0
        %927 = vmatpush1.msra.mxu0 %v301
        %928 = vmatprep.subr.mxu0 0.0
        %929 = vmatpush1.msra.mxu0 %v300
        %930 = vmatprep.subr.mxu0 0.0
        %931 = vmatpush1.msra.mxu0 %v299
        %932 = vmatprep.subr.mxu0 0.0
        %933 = vmatpush1.msra.mxu0 %v298
        %934 = vmatprep.subr.mxu0 0.0
        %935 = vmatpush1.msra.mxu0 %v297
        %936 = vmatprep.subr.mxu0 0.0
        %937 = vmatpush1.msra.mxu0 %v296
        %938 = vmatprep.subr.mxu0 0.0
        %939 = vmatpush1.msra.mxu0 %v295
        %940 = vmatprep.subr.mxu0 0.0
        %941 = vmatpush1.msra.mxu0 %v294
        %942 = vmatprep.subr.mxu0 0.0
        %943 = vmatpush1.msra.mxu0 %v293
        %944 = vmatprep.subr.mxu0 0.0
        %945 = vmatpush1.msra.mxu0 %v292
        %946 = vmatprep.subr.mxu0 0.0
        %947 = vmatpush1.msra.mxu0 %v291
        %948 = vmatprep.subr.mxu0 0.0
        %949 = vmatpush1.msra.mxu0 %v290
        %950 = vmatprep.subr.mxu0 0.0
        %951 = vmatpush1.msra.mxu0 %v289
        %952 = vmatprep.subr.mxu0 0.0
        %953 = vmatpush2.msra.mxu0 0.0
        %954 = vmatprep.subr.mxu0 0.0
        %955 = vmatpush2.msra.mxu0 0.0
        %956 = vmatprep.subr.mxu0 0.0
        %957 = vmatpush2.msra.mxu0 0.0
        %958 = vmatprep.subr.mxu0 0.0
        %959 = vmatpush2.msra.mxu0 0.0
        %960 = vmatprep.subr.mxu0 0.0
        %961 = vmatpush2.msra.mxu0 0.0
        %962 = vmatprep.subr.mxu0 0.0
        %963 = vmatpush2.msra.mxu0 0.0
        %964 = vmatprep.subr.mxu0 0.0
        %965 = vmatpush2.msra.mxu0 0.0
        %966 = vmatprep.subr.mxu0 0.0
        %967 = vmatpush2.msra.mxu0 0.0
        %968 = vmatprep.subr.mxu0 0.0
        %969 = vmatpush2.msra.mxu0 0.0
        %970 = vmatprep.subr.mxu0 0.0
        %971 = vmatpush2.msra.mxu0 0.0
        %972 = vmatprep.subr.mxu0 0.0
        %973 = vmatpush2.msra.mxu0 0.0
        %974 = vmatprep.subr.mxu0 0.0
        %975 = vmatpush2.msra.mxu0 0.0
        %976 = vmatprep.subr.mxu0 0.0
        %977 = vmatpush2.msra.mxu0 0.0
        %978 = vmatprep.subr.mxu0 0.0
        %979 = vmatpush2.msra.mxu0 0.0
        %980 = vmatprep.subr.mxu0 0.0
        %981 = vmatpush2.msra.mxu0 0.0
        %982 = vmatprep.subr.mxu0 0.0
        %983 = vmatpush2.msra.mxu0 0.0
        %984 = vmatprep.mubr.f32.mxu0 0.0
        %985 = vmatmul.mubr.f32.gmra.mxu0 %v918
        %v986 = vpop.f32.mrf.mxu0
        %v987 = vadd.f32 0.0, %v986
        %v988 = vpop.f32.mrf.mxu0
        %989 = vmatprep.mubr.f32.mxu0 0.0
        %990 = vmatmul.mubr.f32.gmra.mxu0 %v919
        %v991 = vpop.f32.mrf.mxu0
        %v992 = vadd.f32 0.0, %v991
        %v993 = vpop.f32.mrf.mxu0
        %994 = vdwg.mxu0
        %995 = vmatprep.subr.mxu0 0.0
        %996 = vmatpush1.msra.mxu0 0.0
        %997 = vmatprep.subr.mxu0 0.0
        %998 = vmatpush1.msra.mxu0 0.0
        %999 = vmatprep.subr.mxu0 0.0
        %1000 = vmatpush1.msra.mxu0 0.0
        %1001 = vmatprep.subr.mxu0 0.0
        %1002 = vmatpush1.msra.mxu0 0.0
        %1003 = vmatprep.subr.mxu0 0.0
        %1004 = vmatpush1.msra.mxu0 0.0
        %1005 = vmatprep.subr.mxu0 0.0
        %1006 = vmatpush1.msra.mxu0 0.0
        %1007 = vmatprep.subr.mxu0 0.0
        %1008 = vmatpush1.msra.mxu0 0.0
        %1009 = vmatprep.subr.mxu0 0.0
        %1010 = vmatpush1.msra.mxu0 0.0
        %1011 = vmatprep.subr.mxu0 0.0
        %1012 = vmatpush1.msra.mxu0 0.0
        %1013 = vmatprep.subr.mxu0 0.0
        %1014 = vmatpush1.msra.mxu0 0.0
        %1015 = vmatprep.subr.mxu0 0.0
        %1016 = vmatpush1.msra.mxu0 0.0
        %1017 = vmatprep.subr.mxu0 0.0
        %1018 = vmatpush1.msra.mxu0 0.0
        %1019 = vmatprep.subr.mxu0 0.0
        %1020 = vmatpush1.msra.mxu0 0.0
        %1021 = vmatprep.subr.mxu0 0.0
        %1022 = vmatpush1.msra.mxu0 0.0
        %1023 = vmatprep.subr.mxu0 0.0
        %1024 = vmatpush1.msra.mxu0 %v992
        %1025 = vmatprep.subr.mxu0 0.0
        %1026 = vmatpush1.msra.mxu0 %v987
        %1027 = vmatprep.subr.mxu0 0.0
        %1028 = vmatpush2.msra.mxu0 0.0
        %1029 = vmatprep.subr.mxu0 0.0
        %1030 = vmatpush2.msra.mxu0 0.0
        %1031 = vmatprep.subr.mxu0 0.0
        %1032 = vmatpush2.msra.mxu0 0.0
        %1033 = vmatprep.subr.mxu0 0.0
        %1034 = vmatpush2.msra.mxu0 0.0
        %1035 = vmatprep.subr.mxu0 0.0
        %1036 = vmatpush2.msra.mxu0 0.0
        %1037 = vmatprep.subr.mxu0 0.0
        %1038 = vmatpush2.msra.mxu0 0.0
        %1039 = vmatprep.subr.mxu0 0.0
        %1040 = vmatpush2.msra.mxu0 0.0
        %1041 = vmatprep.subr.mxu0 0.0
        %1042 = vmatpush2.msra.mxu0 0.0
        %1043 = vmatprep.subr.mxu0 0.0
        %1044 = vmatpush2.msra.mxu0 0.0
        %1045 = vmatprep.subr.mxu0 0.0
        %1046 = vmatpush2.msra.mxu0 0.0
        %1047 = vmatprep.subr.mxu0 0.0
        %1048 = vmatpush2.msra.mxu0 0.0
        %1049 = vmatprep.subr.mxu0 0.0
        %1050 = vmatpush2.msra.mxu0 0.0
        %1051 = vmatprep.subr.mxu0 0.0
        %1052 = vmatpush2.msra.mxu0 0.0
        %1053 = vmatprep.subr.mxu0 0.0
        %1054 = vmatpush2.msra.mxu0 0.0
        %1055 = vmatprep.subr.mxu0 0.0
        %1056 = vmatpush2.msra.mxu0 0.0
        %1057 = vmatprep.subr.mxu0 0.0
        %1058 = vmatpush2.msra.mxu0 0.0
        %1059 = vmatprep.mubr.f32.mxu0 0.0
        %1060 = vmatmul.mubr.f32.gmra.mxu0 %v384
        %v1061 = vpop.f32.mrf.mxu0
        %v1062 = vadd.f32 0.0, %v1061
        %v1063 = vpop.f32.mrf.mxu0
        %1064 = vmatprep.mubr.f32.mxu0 0.0
        %1065 = vmatmul.mubr.f32.gmra.mxu0 %v387
        %v1066 = vpop.f32.mrf.mxu0
        %v1067 = vadd.f32 0.0, %v1066
        %v1068 = vpop.f32.mrf.mxu0
        %1069 = vdwg.mxu0
        %v1070 = vmul.f32 %v456, %v456
        %v1071 = vmul.f32 %v461, %v461
        %v1072 = vmul.f32 %v606, %v606
        %v1073 = vmul.f32 %v611, %v611
        %v1074 = vmul.f32 %v456, %v606
        %v1075 = vmul.f32 %v461, %v611
        %v1076 = vsub.f32 %v758, %v1070
        %v1077 = vsub.f32 %v763, %v1071
        %v1078 = vsub.f32 %v910, %v1072
        %v1079 = vsub.f32 %v915, %v1073
        %v1080 = vsub.f32 %v1062, %v1074
        %v1081 = vsub.f32 %v1067, %v1075
        %v1082 = vmul.f32 %v1074, 2.0
        %v1083 = vmul.f32 %v1075, 2.0
        %v1084 = vadd.f32 %v1082, 0.0001
        %v1085 = vadd.f32 %v1083, 0.0001
        %v1086 = vmul.f32 %v1080, 2.0
        %v1087 = vmul.f32 %v1081, 2.0
        %v1088 = vadd.f32 %v1086, 0.0009
        %v1089 = vadd.f32 %v1087, 0.0009
        %v1090 = vmul.f32 %v1084, %v1088
        %v1091 = vmul.f32 %v1085, %v1089
        %v1092 = vadd.f32 %v1070, %v1072
        %v1093 = vadd.f32 %v1071, %v1073
        %v1094 = vadd.f32 %v1092, 0.0001
        %v1095 = vadd.f32 %v1093, 0.0001
        %v1096 = vadd.f32 %v1076, %v1078
        %v1097 = vadd.f32 %v1077, %v1079
        %v1098 = vadd.f32 %v1096, 0.0009
        %v1099 = vadd.f32 %v1097, 0.0009
        %v1100 = vmul.f32 %v1094, %v1098
        %v1101 = vmul.f32 %v1095, %v1099
        %v1102 = vrcp.pop %v1100
        %v1103 = vmul.f32 %v1090, %v1102
        %v1104 = vrcp.pop %v1101
        %v1105 = vmul.f32 %v1091, %v1104
        %v1106 = vadd.f32 %v1103, %v1105
        %1107 = vst [vmem:[%s284] sm:$0xff] %v1106
        %s1108 = sand.u32 %s127, 1
        %s1109 = scalar_lea.sflag [#allocation4], %s1108
        %s1110 = sand.u32 %s127, 1
        %s1111 = smul.addr %s1110, 8
        %s1112 = scalar_lea.vmem [#allocation10], %s1111
        // Predicated region
        $region53: #{tpu_custom_call.1} parent=35 // pred_check
          %p1113 = pneg %p137
        $region54: #{tpu_custom_call.1} parent=35 // pred_check_branch
          %1115 = sbr.rel (%p1113) target = $region56
        $region55: #{tpu_custom_call.1} parent=35 // pred_region
          %s1117 = ssub.s32 128, 128
          %1118 = vsyncadd %s1109, %s1117
          %s1119 = smul.addr %s25, 128
          %s1120 = scalar_lea.hbm %s4, %s1119
          %s1122 = sshll.u32 %s1112, 4
          %s1123 = int_to_ptr.vmem [resolvable:$true] %s1122
          %1125 = dma.vmem_to_hbm [thread:$0]  %s1123, 128, %s1120, %s1109
        $region56: #{tpu_custom_call.1} parent=35 // pred_fallthru
          _
      $region36: #{tpu_custom_call.1} parent=5 // pred_fallthru
        _
      %p1126 = scmp.le.s32.totalorder 2, %s20
      // Predicated region
      $region57: #{tpu_custom_call.1} parent=5 // pred_check
        %p1127 = pneg %p1126
      $region58: #{tpu_custom_call.1} parent=5 // pred_check_branch
        %1129 = sbr.rel (%p1127) target = $region60
      $region59: #{tpu_custom_call.1} parent=5 // pred_region
        %s1130 = ssub.s32 %s20, 2
        // Predicated region
        $region61: #{tpu_custom_call.1} parent=59 // pred_check
          %p1131 = pneg %p143
        $region62: #{tpu_custom_call.1} parent=59 // pred_check_branch
          %1133 = sbr.rel (%p1131) target = $region64
        $region63: #{tpu_custom_call.1} parent=59 // pred_region
          %s1134 = sand.u32 %s128, 1
          %s1135 = scalar_lea.sflag [#allocation4], %s1134
          %s1136 = sand.u32 %s128, 1
          %s1137 = smul.addr %s1136, 8
          %s1138 = scalar_lea.vmem [#allocation10], %s1137
          %1139 = dma.done %s1135, 128
        $region64: #{tpu_custom_call.1} parent=59 // pred_fallthru
          _
      $region60: #{tpu_custom_call.1} parent=5 // pred_fallthru
        _
    $region6: #{tpu_custom_call.1} parent=1 // loop_footer
      %s24 = sadd.s32 1, %s20
    $region7: #{tpu_custom_call.1} parent=1 // loop_footer_branch
      %19 = sbr.rel target = $region3
    $region8: #{tpu_custom_call.1} parent=1 // loop_exit
      _
    %1140 = vsyncpa [#allocation3], 1
    %s1141 = scalar_lea.sflag [#allocation3], 1
    %1142 = vsyncpa %s1141, 1
    %1143 = vsyncpa [#allocation6], 1
    %s1144 = scalar_lea.sflag [#allocation6], 1
    %1145 = vsyncpa %s1144, 1
    %1146 = vsyncpa [#allocation9], 1
    %1147 = vsyncpa [#allocation4], 1
    %s1148 = scalar_lea.sflag [#allocation4], 1
    %1149 = vsyncpa %s1148, 1

</llo_original>
